<compile_context>
chip_gen: v5e
topology: v5e:2x2
jax: 0.10.0
libtpu: 0.0.40
codegen_flags: <defaults>
</compile_context>

<pallas_src>
import functools
import math

import jax
import jax.numpy as jnp
from jax import lax
from jax.experimental import pallas as pl
from jax.experimental.pallas import tpu as pltpu

NEG_FILL = -9000000000000000.0   # exactly the constant used by the PyTorch module
_LANE = 128
_VMEM_LIMIT = 32 * 1024 * 1024   # explicit: v5e's scoped default is only 16 MiB


def _round_up(x, m):
    return (x + m - 1) // m * m


def _pick_tile(n_pad, target):
    """Largest multiple of 128 <= target that divides n_pad (n_pad % 128 == 0)."""
    t = min(target, n_pad)
    while n_pad % t:
        t -= _LANE
    return t


# ----------------------------------------------------------------------------
# Stage 1: lane-dense projection + attention scores.
# ----------------------------------------------------------------------------
def _proj_kernel(h_ref, wpad_ref, wa1_ref, wa2_ref, wh_ref, s1_ref, s2_ref):
    h = h_ref[...]
    # Wh (f32 accumulate, stored in the streaming dtype -> bf16 on fast path).
    wh_ref[...] = jnp.dot(h, wpad_ref[...],
                          preferred_element_type=jnp.float32).astype(wh_ref.dtype)
    # per-row score s1 = h @ (W a1): broadcast-mul + lane reduce (f32 accumulate).
    s1_ref[...] = jnp.sum(h * wa1_ref[...], axis=1, keepdims=True,
                          dtype=jnp.float32)
    # per-column score s2 built directly as a [1, TM] row (no transpose anywhere).
    s2_ref[...] = lax.dot_general(wa2_ref[...], h, (((1,), (1,)), ((), ())),
                                  preferred_element_type=jnp.float32)


# ----------------------------------------------------------------------------
# Stage 2: masked attention, flash-style online row softmax + aggregation.
# grid = (row_tiles, col_tiles); the column axis is the reduction ("arbitrary").
# ----------------------------------------------------------------------------
def _attn_kernel(s1_ref, s2_ref, adj_ref, whc_ref, o_ref,
                 m_sc, l_sc, acc_sc, *,
                 alpha, concat, softmax_dtype, approx_recip):
    k = pl.program_id(1)

    @pl.when(k == 0)
    def _init():
        m_sc[...] = jnp.full_like(m_sc, -jnp.inf)
        l_sc[...] = jnp.zeros_like(l_sc)
        acc_sc[...] = jnp.zeros_like(acc_sc)

    e = s1_ref[...] + s2_ref[...]                 # [TM, TK] broadcast add (f32)
    if 0.0 <= alpha <= 1.0:
        e = jnp.maximum(e, alpha * e)             # LeakyReLU: 1 mul + 1 max
    else:
        e = jnp.where(e > 0, e, alpha * e)
    att = jnp.where(adj_ref[...] > 0, e, jnp.full_like(e, NEG_FILL))

    # online softmax update (masked entries self-correct: once a real max is
    # seen, exp(NEG_FILL - m) underflows to 0).
    m_prev = m_sc[...]
    m_new = jnp.maximum(m_prev, jnp.max(att, axis=1, keepdims=True))
    scale = jnp.exp(m_prev - m_new)
    p = jnp.exp((att - m_new).astype(softmax_dtype))
    l_sc[...] = scale * l_sc[...] + jnp.sum(p, axis=1, keepdims=True,
                                            dtype=jnp.float32)
    acc_sc[...] = scale * acc_sc[...] + jnp.dot(
        p.astype(whc_ref.dtype), whc_ref[...],
        preferred_element_type=jnp.float32)
    m_sc[...] = m_new

    @pl.when(k == pl.num_programs(1) - 1)
    def _finalize():
        h_prime = acc_sc[...] * pl.reciprocal(l_sc[...], approx=approx_recip)
        if concat:
            # ELU (alpha = 1.0, PyTorch default); min() keeps exp() finite.
            h_prime = jnp.where(h_prime > 0, h_prime,
                                jnp.exp(jnp.minimum(h_prime, 0.0)) - 1.0)
        o_ref[...] = h_prime.astype(o_ref.dtype)


# ----------------------------------------------------------------------------
# Wrapper
# ----------------------------------------------------------------------------
def gat_forward(h, adj, W, a, *, alpha=0.2, concat=True,
                compute_dtype=jnp.bfloat16, softmax_dtype=jnp.float32,
                row_block=256, col_block=512, proj_block=512):
    """GraphAttentionLayer forward (eval mode).

    h: [N, F_in], adj: [N, N] (only `> 0` is used; pass an int8 0/1 mask to
    skip the O(N^2) conversion), W: [F_in, F_out], a: [2*F_out, 1].
    Returns [N, F_out] float32.

    compute_dtype: MXU input dtype (bfloat16 fast path / float32 exact path).
    softmax_dtype: dtype for the exp() in the softmax; bfloat16 is beneficial
                   on v6e/v7x (bf16 EUP/VALU), keep float32 on v5e.
    """
    n, f_in = h.shape
    f_out = W.shape[1]
    assert a.shape == (2 * f_out, 1)
    cd = jnp.dtype(compute_dtype)
    sd = jnp.dtype(softmax_dtype)
    fast = cd == jnp.dtype(jnp.bfloat16)
    stream_dtype = jnp.bfloat16 if fast else jnp.float32   # Wh HBM stream dtype
    approx_recip = fast

    f_pad = _round_up(f_out, _LANE)

    # --- node-dim padding & tile selection (all multiples of 128) -----------
    n_pad = _round_up(n, _LANE)
    tk = _pick_tile(n_pad, col_block)          # stage-2 reduction (column) tile
    tm = _pick_tile(n_pad, row_block)          # stage-2 row tile
    if n_pad // tm < 2 and n_pad > _LANE:      # keep >= 2 row tiles for v7x's 2 TCs
        tm = _pick_tile(n_pad, n_pad // 2)
    tm1 = _pick_tile(n_pad, proj_block)        # stage-1 row tile (large, K=f_in is tiny)

    # --- wrapper-side layout plumbing (O(N) / O(f) work only, plus the adj
    #     mask conversion which callers can hoist by passing int8) ------------
    w32 = W.astype(jnp.float32)
    a32 = a.astype(jnp.float32)
    w_pad = jnp.zeros((f_in, f_pad), jnp.float32).at[:, :f_out].set(w32)
    wa1_row = (w32 @ a32[:f_out, :]).T                       # [1, F_in]
    wa2_row = (w32 @ a32[f_out:, :]).T                       # [1, F_in]

    if n_pad == n:
        h_p = h.astype(jnp.float32)
    else:
        h_p = jnp.zeros((n_pad, f_in), jnp.float32).at[:n, :].set(
            h.astype(jnp.float32))

    if adj.dtype == jnp.int8:
        adj_i8 = adj                                         # pre-thresholded mask
    else:
        adj_i8 = (adj > 0).astype(jnp.int8)
    if adj_i8.shape != (n_pad, n_pad):
        adj_i8 = jnp.zeros((n_pad, n_pad), jnp.int8).at[:n, :n].set(adj_i8)

    h_c = h_p.astype(cd)
    w_pad_c = w_pad.astype(cd)
    wa1_c = wa1_row.astype(cd)
    wa2_c = wa2_row.astype(cd)

    itemsize = jnp.dtype(cd).itemsize
    wh_bytes = jnp.dtype(stream_dtype).itemsize

    # --- stage 1: projection -------------------------------------------------
    ce1 = pl.CostEstimate(
        flops=2 * n_pad * f_in * (f_pad + 2),
        transcendentals=0,
        bytes_accessed=(n_pad * f_in * itemsize + f_in * f_pad * itemsize
                        + n_pad * f_pad * wh_bytes + n_pad * 8))
    wh, s1_col, s2_row = pl.pallas_call(
        _proj_kernel,
        grid=(n_pad // tm1,),
        in_specs=[
            pl.BlockSpec((tm1, f_in), lambda i: (i, 0)),       # h row tile
            pl.BlockSpec((f_in, f_pad), lambda i: (0, 0)),     # W_pad (resident)
            pl.BlockSpec((1, f_in), lambda i: (0, 0)),         # (W a1)^T row
            pl.BlockSpec((1, f_in), lambda i: (0, 0)),         # (W a2)^T row
        ],
        out_specs=[
            pl.BlockSpec((tm1, f_pad), lambda i: (i, 0)),      # Wh (stream dtype)
            pl.BlockSpec((tm1, 1), lambda i: (i, 0)),          # s1 column
            pl.BlockSpec((1, tm1), lambda i: (0, i)),          # s2 row
        ],
        out_shape=[
            jax.ShapeDtypeStruct((n_pad, f_pad), stream_dtype),
            jax.ShapeDtypeStruct((n_pad, 1), jnp.float32),
            jax.ShapeDtypeStruct((1, n_pad), jnp.float32),
        ],
        compiler_params=pltpu.CompilerParams(
            dimension_semantics=("parallel",),
            vmem_limit_bytes=_VMEM_LIMIT),
        cost_estimate=ce1,
    )(h_c, w_pad_c, wa1_c, wa2_c)

    # --- stage 2: attention + aggregation ------------------------------------
    kernel2 = functools.partial(
        _attn_kernel, alpha=float(alpha), concat=bool(concat),
        softmax_dtype=sd, approx_recip=approx_recip)
    row_tiles = n_pad // tm
    ce2 = pl.CostEstimate(
        flops=2 * n_pad * n_pad * f_pad + 12 * n_pad * n_pad,
        transcendentals=n_pad * n_pad,
        bytes_accessed=(n_pad * n_pad                          # adj (int8)
                        + row_tiles * n_pad * f_pad * wh_bytes # Wh re-stream
                        + n_pad * f_pad * 4                    # output
                        + n_pad * 8))                          # s1 + s2
    out = pl.pallas_call(
        kernel2,
        grid=(row_tiles, n_pad // tk),
        in_specs=[
            pl.BlockSpec((tm, 1), lambda i, k: (i, 0)),        # s1 (row scores)
            pl.BlockSpec((1, tk), lambda i, k: (0, k)),        # s2 (col scores)
            pl.BlockSpec((tm, tk), lambda i, k: (i, k)),       # adj tile (int8)
            pl.BlockSpec((tk, f_pad), lambda i, k: (k, 0)),    # Wh column tile
        ],
        out_specs=pl.BlockSpec((tm, f_pad), lambda i, k: (i, 0)),
        out_shape=jax.ShapeDtypeStruct((n_pad, f_pad), jnp.float32),
        scratch_shapes=[
            pltpu.VMEM((tm, 1), jnp.float32),        # running row max
            pltpu.VMEM((tm, 1), jnp.float32),        # running denominator
            pltpu.VMEM((tm, f_pad), jnp.float32),    # running numerator
        ],
        compiler_params=pltpu.CompilerParams(
            dimension_semantics=("parallel", "arbitrary"),
            vmem_limit_bytes=_VMEM_LIMIT),
        cost_estimate=ce2,
    )(s1_col, s2_row, adj_i8, wh)

    return out[:n, :f_out]


# ----------------------------------------------------------------------------
# Reference + test
# ----------------------------------------------------------------------------
def _xavier_uniform(key, shape, gain):
    fan_in, fan_out = shape[0], shape[1]
    bound = gain * math.sqrt(6.0 / (fan_in + fan_out))
    return jax.random.uniform(key, shape, jnp.float32, minval=-bound, maxval=bound)


def _reference(h, adj, W, a, alpha=0.2, concat=True):
    """Pure-JAX float32 reference mirroring the PyTorch forward (eval mode)."""
    f_out = W.shape[1]
    Wh = h @ W
    Wh1 = Wh @ a[:f_out, :]
    Wh2 = Wh @ a[f_out:, :]
    e = Wh1 + Wh2.T
    e = jnp.where(e > 0, e, alpha * e)
    att = jnp.where(adj > 0, e, jnp.full_like(e, NEG_FILL))
    att = jax.nn.softmax(att, axis=1)
    h_prime = att @ Wh
    return jax.nn.elu(h_prime) if concat else h_prime


if __name__ == "__main__":
    N, F_IN, F_OUT = 256, 32, 32
    key = jax.random.PRNGKey(0)
    k_h, k_adj, k_w, k_a = jax.random.split(key, 4)

    h = jax.random.normal(k_h, (N, F_IN), jnp.float32)
    adj = (jax.random.uniform(k_adj, (N, N)) < 0.1).astype(jnp.float32)
    adj = jnp.maximum(adj, jnp.eye(N, dtype=jnp.float32))     # self-loops

    W = _xavier_uniform(k_w, (F_IN, F_OUT), gain=1.414)
    a = _xavier_uniform(k_a, (2 * F_OUT, 1), gain=1.414)

    ref = _reference(h, adj, W, a)

    # 1) Exact-semantics path (f32 MXU inputs), default (large) tiles.
    out_f32 = jax.block_until_ready(
        gat_forward(h, adj, W, a, compute_dtype=jnp.float32))
    err = float(jnp.max(jnp.abs(out_f32 - ref)))
    assert jnp.allclose(out_f32, ref, atol=5e-4, rtol=5e-4), \
        f"f32 kernel mismatch, max |diff| = {err}"

    # 2) Same exact path but with small tiles to exercise the multi-tile
    #    online-softmax reduction (grid = (2, 2) at N=256).
    out_tiled = jax.block_until_ready(
        gat_forward(h, adj, W, a, compute_dtype=jnp.float32,
                    row_block=128, col_block=128))
    err = float(jnp.max(jnp.abs(out_tiled - ref)))
    assert jnp.allclose(out_tiled, ref, atol=5e-4, rtol=5e-4), \
        f"f32 multi-tile kernel mismatch, max |diff| = {err}"

    # 3) Default fast path (bf16 MXU inputs + bf16 Wh stream, f32 accumulate):
    #    reduced-precision logits -> loose tolerance vs the f32 reference.
    out_bf16 = jax.block_until_ready(gat_forward(h, adj, W, a))
    err = float(jnp.max(jnp.abs(out_bf16 - ref)))
    assert jnp.allclose(out_bf16, ref, atol=1e-1, rtol=1e-1), \
        f"bf16 kernel mismatch, max |diff| = {err}"

    print("KERNEL_OK")
</pallas_src>

<mosaic_0001>
module attributes {stable_mosaic.version = 11 : i64} {
  func.func @_proj_kernel(%arg0: i32, %arg1: memref<256x32xf32, #tpu.memory_space<vmem>>, %arg2: memref<32x128xf32, #tpu.memory_space<vmem>>, %arg3: memref<1x32xf32, #tpu.memory_space<vmem>>, %arg4: memref<1x32xf32, #tpu.memory_space<vmem>>, %arg5: memref<256x128xf32, #tpu.memory_space<vmem>>, %arg6: memref<256x1xf32, #tpu.memory_space<vmem>>, %arg7: memref<1x256xf32, #tpu.memory_space<vmem>>) attributes {dimension_semantics = [#tpu.dimension_semantics<parallel>], iteration_bounds = array<i64: 1>, scalar_prefetch = 0 : i64, scratch_operands = 0 : i64, tpu.core_type = #tpu.core_type<tc>, window_params = [{transform_indices = @transform_0, window_bounds = array<i64: 256, 32>}, {pipeline_mode = #tpu.pipeline_mode<synchronous>, transform_indices = @transform_1, window_bounds = array<i64: 32, 128>}, {pipeline_mode = #tpu.pipeline_mode<synchronous>, transform_indices = @transform_2, window_bounds = array<i64: 1, 32>}, {pipeline_mode = #tpu.pipeline_mode<synchronous>, transform_indices = @transform_3, window_bounds = array<i64: 1, 32>}, {transform_indices = @transform_4, window_bounds = array<i64: 256, 128>}, {transform_indices = @transform_5, window_bounds = array<i64: 256, 1>}, {transform_indices = @transform_6, window_bounds = array<i64: 1, 256>}]} {
    %c0 = arith.constant 0 : index
    %c0_0 = arith.constant 0 : index
    %0 = vector.load %arg1[%c0, %c0_0] : memref<256x32xf32, #tpu.memory_space<vmem>>, vector<256x32xf32>
    %c0_1 = arith.constant 0 : index
    %c0_2 = arith.constant 0 : index
    %1 = vector.load %arg2[%c0_1, %c0_2] : memref<32x128xf32, #tpu.memory_space<vmem>>, vector<32x128xf32>
    %cst = arith.constant dense<0.000000e+00> : vector<256x128xf32>
    %2 = tpu.matmul %0, %1, %cst {dimension_numbers = #tpu.dot_dimension_numbers<[1], [0], [0], [1], [0, 0, 1, 1], [], []>} : vector<256x32xf32>, vector<32x128xf32>, vector<256x128xf32> -> vector<256x128xf32>
    %c0_3 = arith.constant 0 : index
    %c0_4 = arith.constant 0 : index
    %3 = vector.load %arg5[%c0_3, %c0_4] : memref<256x128xf32, #tpu.memory_space<vmem>>, vector<256x128xf32>
    tpu.vector_store %arg5[%c0_3, %c0_4], %2 {strides = array<i32>} : memref<256x128xf32, #tpu.memory_space<vmem>>, vector<256x128xf32>,
    %c0_5 = arith.constant 0 : index
    %c0_6 = arith.constant 0 : index
    %4 = vector.load %arg3[%c0_5, %c0_6] : memref<1x32xf32, #tpu.memory_space<vmem>>, vector<1x32xf32>
    %5 = vector.broadcast %4 : vector<1x32xf32> to vector<256x32xf32>
    %6 = arith.mulf %0, %5 : vector<256x32xf32>
    %cst_7 = arith.constant dense<0.000000e+00> : vector<256xf32>
    %7 = vector.multi_reduction <add>, %6, %cst_7 [1] : vector<256x32xf32> to vector<256xf32>
    %8 = vector.shape_cast %7 : vector<256xf32> to vector<256x1xf32>
    %c0_8 = arith.constant 0 : index
    %c0_9 = arith.constant 0 : index
    %9 = vector.load %arg6[%c0_8, %c0_9] : memref<256x1xf32, #tpu.memory_space<vmem>>, vector<256x1xf32>
    tpu.vector_store %arg6[%c0_8, %c0_9], %8 {strides = array<i32>} : memref<256x1xf32, #tpu.memory_space<vmem>>, vector<256x1xf32>,
    %c0_10 = arith.constant 0 : index
    %c0_11 = arith.constant 0 : index
    %10 = vector.load %arg4[%c0_10, %c0_11] : memref<1x32xf32, #tpu.memory_space<vmem>>, vector<1x32xf32>
    %cst_12 = arith.constant dense<0.000000e+00> : vector<1x256xf32>
    %11 = tpu.matmul %10, %0, %cst_12 {dimension_numbers = #tpu.dot_dimension_numbers<[1], [1], [0], [0], [0, 0, 1, 0], [], []>} : vector<1x32xf32>, vector<256x32xf32>, vector<1x256xf32> -> vector<1x256xf32>
    %c0_13 = arith.constant 0 : index
    %c0_14 = arith.constant 0 : index
    %12 = vector.load %arg7[%c0_13, %c0_14] : memref<1x256xf32, #tpu.memory_space<vmem>>, vector<1x256xf32>
    tpu.vector_store %arg7[%c0_13, %c0_14], %11 {strides = array<i32>} : memref<1x256xf32, #tpu.memory_space<vmem>>, vector<1x256xf32>,
    return
  }
  func.func @transform_0(%arg0: i32) -> (i32, i32) {
    %c0_i32 = arith.constant 0 : i32
    %c0_i32_0 = arith.constant 0 : i32
    return %arg0, %c0_i32 : i32, i32
  }
  func.func @transform_1(%arg0: i32) -> (i32, i32) {
    %c0_i32 = arith.constant 0 : i32
    %c0_i32_0 = arith.constant 0 : i32
    %c0_i32_1 = arith.constant 0 : i32
    return %c0_i32, %c0_i32_0 : i32, i32
  }
  func.func @transform_2(%arg0: i32) -> (i32, i32) {
    %c0_i32 = arith.constant 0 : i32
    %c0_i32_0 = arith.constant 0 : i32
    %c0_i32_1 = arith.constant 0 : i32
    return %c0_i32, %c0_i32_0 : i32, i32
  }
  func.func @transform_3(%arg0: i32) -> (i32, i32) {
    %c0_i32 = arith.constant 0 : i32
    %c0_i32_0 = arith.constant 0 : i32
    %c0_i32_1 = arith.constant 0 : i32
    return %c0_i32, %c0_i32_0 : i32, i32
  }
  func.func @transform_4(%arg0: i32) -> (i32, i32) {
    %c0_i32 = arith.constant 0 : i32
    %c0_i32_0 = arith.constant 0 : i32
    return %arg0, %c0_i32 : i32, i32
  }
  func.func @transform_5(%arg0: i32) -> (i32, i32) {
    %c0_i32 = arith.constant 0 : i32
    %c0_i32_0 = arith.constant 0 : i32
    return %arg0, %c0_i32 : i32, i32
  }
  func.func @transform_6(%arg0: i32) -> (i32, i32) {
    %c0_i32 = arith.constant 0 : i32
    %c0_i32_0 = arith.constant 0 : i32
    return %c0_i32, %arg0 : i32, i32
  }
}

</mosaic_0001>

<llo_original>
// kernel: tpu_custom_call.1
$region0: #{tpu_custom_call.1}
  #allocation0 [shape = 'u32[]', space=smem, size = 0x4, offset = 0x4, fixed_abs, tag = 'smem constant byte address 0x4 - core index']
  #allocation1 [shape = 'u32[72,128]{1,0:T(1,128)}', space=vmem, size = 0x9000, scoped, tag = 'internal scratch']
  %s0 = inlined_call_operand.vmem [shape: f32[256,32], index: 0, kind: input, shape index: {}]
  %s1 = inlined_call_operand.vmem [shape: f32[32,128], index: 1, kind: input, shape index: {}]
  %s2 = inlined_call_operand.vmem [shape: f32[1,32], index: 2, kind: input, shape index: {}]
  %s3 = inlined_call_operand.vmem [shape: f32[1,32], index: 3, kind: input, shape index: {}]
  %s4 = inlined_call_operand.hbm [shape: f32[256,128], index: 4, kind: output, shape index: {0}]
  %s5 = inlined_call_operand.vmem [shape: f32[256,1], index: 5, kind: output, shape index: {1}]
  %s6 = inlined_call_operand.hbm [shape: f32[1,256], index: 6, kind: output, shape index: {2}]
  %7 = xla_tuple %s4, %s5, %s6
  %s8 = sld [smem:[#allocation0]]
  $region42: #{tpu_custom_call.1} parent=0
    _
  %s10 = ssub.s32 1, %s8
  %s11 = scalar_select 0, %s10, %s8
  $region1: #{tpu_custom_call.1} parent=0
    #allocation2 [shape = 'u8[131072]{0}', space=vmem, size = 0x20000, scoped, tag = 'output window, operand 0, single buffered']
    #allocation3 [shape = 's32[1]{0}', space=sflag, size = 0x4, scoped, tag = 'scoped memory for tpu_custom_call.1']
    #allocation4 [shape = 'u8[1024]{0}', space=vmem, size = 0x400, scoped, tag = 'output window, operand 2, single buffered']
    #allocation5 [shape = 's32[1]{0}', space=sflag, size = 0x4, scoped, tag = 'scoped memory for tpu_custom_call.1']
    %12 = vsyncpa [#allocation3], 0
    %13 = vsyncpa [#allocation5], 0
    // Predicated region
    $region2: #{tpu_custom_call.1} parent=1 // pred_check
      _
    $region3: #{tpu_custom_call.1} parent=1 // pred_check_branch
      %15 = sbr.rel (0) target = $region5
    $region4: #{tpu_custom_call.1} parent=1 // pred_region
      _
    $region5: #{tpu_custom_call.1} parent=1 // pred_fallthru
      _
    // Predicated region
    $region6: #{tpu_custom_call.1} parent=1 // pred_check
      _
    $region7: #{tpu_custom_call.1} parent=1 // pred_check_branch
      %17 = sbr.rel (0) target = $region9
    $region8: #{tpu_custom_call.1} parent=1 // pred_region
      _
    $region9: #{tpu_custom_call.1} parent=1 // pred_fallthru
      _
    // Predicated region
    $region10: #{tpu_custom_call.1} parent=1 // pred_check
      _
    $region11: #{tpu_custom_call.1} parent=1 // pred_check_branch
      %19 = sbr.rel (0) target = $region13
    $region12: #{tpu_custom_call.1} parent=1 // pred_region
      _
    $region13: #{tpu_custom_call.1} parent=1 // pred_fallthru
      _
    // Predicated region
    $region14: #{tpu_custom_call.1} parent=1 // pred_check
      _
    $region15: #{tpu_custom_call.1} parent=1 // pred_check_branch
      %21 = sbr.rel (0) target = $region17
    $region16: #{tpu_custom_call.1} parent=1 // pred_region
      _
    $region17: #{tpu_custom_call.1} parent=1 // pred_fallthru
      _
    %v22 = vld [vmem:[%s0] sm:$0xff]
    %v23 = vld [vmem:[%s0 + $0x8] sm:$0xff]
    %v24 = vld [vmem:[%s0 + $0x10] sm:$0xff]
    %v25 = vld [vmem:[%s0 + $0x18] sm:$0xff]
    %v26 = vld [vmem:[%s0 + $0x20] sm:$0xff]
    %v27 = vld [vmem:[%s0 + $0x28] sm:$0xff]
    %v28 = vld [vmem:[%s0 + $0x30] sm:$0xff]
    %v29 = vld [vmem:[%s0 + $0x38] sm:$0xff]
    %v30 = vld [vmem:[%s0 + $0x40] sm:$0xff]
    %v31 = vld [vmem:[%s0 + $0x48] sm:$0xff]
    %v32 = vld [vmem:[%s0 + $0x50] sm:$0xff]
    %v33 = vld [vmem:[%s0 + $0x58] sm:$0xff]
    %v34 = vld [vmem:[%s0 + $0x60] sm:$0xff]
    %v35 = vld [vmem:[%s0 + $0x68] sm:$0xff]
    %v36 = vld [vmem:[%s0 + $0x70] sm:$0xff]
    %v37 = vld [vmem:[%s0 + $0x78] sm:$0xff]
    %v38 = vld [vmem:[%s0 + $0x80] sm:$0xff]
    %v39 = vld [vmem:[%s0 + $0x88] sm:$0xff]
    %v40 = vld [vmem:[%s0 + $0x90] sm:$0xff]
    %v41 = vld [vmem:[%s0 + $0x98] sm:$0xff]
    %v42 = vld [vmem:[%s0 + $0xa0] sm:$0xff]
    %v43 = vld [vmem:[%s0 + $0xa8] sm:$0xff]
    %v44 = vld [vmem:[%s0 + $0xb0] sm:$0xff]
    %v45 = vld [vmem:[%s0 + $0xb8] sm:$0xff]
    %v46 = vld [vmem:[%s0 + $0xc0] sm:$0xff]
    %v47 = vld [vmem:[%s0 + $0xc8] sm:$0xff]
    %v48 = vld [vmem:[%s0 + $0xd0] sm:$0xff]
    %v49 = vld [vmem:[%s0 + $0xd8] sm:$0xff]
    %v50 = vld [vmem:[%s0 + $0xe0] sm:$0xff]
    %v51 = vld [vmem:[%s0 + $0xe8] sm:$0xff]
    %v52 = vld [vmem:[%s0 + $0xf0] sm:$0xff]
    %v53 = vld [vmem:[%s0 + $0xf8] sm:$0xff]
    %v54 = vld [vmem:[%s1] sm:$0xff]
    %v55 = vld [vmem:[%s1 + $0x8] sm:$0xff]
    %v56 = vld [vmem:[%s1 + $0x10] sm:$0xff]
    %v57 = vld [vmem:[%s1 + $0x18] sm:$0xff]
    %vm58 = vcmask 261120
    %v60 = vsel %vm58, %v22, 0
    %v63 = vsel %vm58, %v23, 0
    %v66 = vsel %vm58, %v24, 0
    %v69 = vsel %vm58, %v25, 0
    %v72 = vsel %vm58, %v26, 0
    %v75 = vsel %vm58, %v27, 0
    %v78 = vsel %vm58, %v28, 0
    %v81 = vsel %vm58, %v29, 0
    %v84 = vsel %vm58, %v30, 0
    %v87 = vsel %vm58, %v31, 0
    %v90 = vsel %vm58, %v32, 0
    %v93 = vsel %vm58, %v33, 0
    %v96 = vsel %vm58, %v34, 0
    %v99 = vsel %vm58, %v35, 0
    %v102 = vsel %vm58, %v36, 0
    %v105 = vsel %vm58, %v37, 0
    %v108 = vsel %vm58, %v38, 0
    %v111 = vsel %vm58, %v39, 0
    %v114 = vsel %vm58, %v40, 0
    %v117 = vsel %vm58, %v41, 0
    %v120 = vsel %vm58, %v42, 0
    %v123 = vsel %vm58, %v43, 0
    %v126 = vsel %vm58, %v44, 0
    %v129 = vsel %vm58, %v45, 0
    %v132 = vsel %vm58, %v46, 0
    %v135 = vsel %vm58, %v47, 0
    %v138 = vsel %vm58, %v48, 0
    %v141 = vsel %vm58, %v49, 0
    %v144 = vsel %vm58, %v50, 0
    %v147 = vsel %vm58, %v51, 0
    %v150 = vsel %vm58, %v52, 0
    %v153 = vsel %vm58, %v53, 0
    %155 = vmatpush.msra.mxu0 0.0
    %156 = vmatpush.msra.mxu0 0.0
    %157 = vmatpush.msra.mxu0 0.0
    %158 = vmatpush.msra.mxu0 0.0
    %159 = vmatpush.msra.mxu0 0.0
    %160 = vmatpush.msra.mxu0 0.0
    %161 = vmatpush.msra.mxu0 0.0
    %162 = vmatpush.msra.mxu0 0.0
    %163 = vmatpush.msra.mxu0 0.0
    %164 = vmatpush.msra.mxu0 0.0
    %165 = vmatpush.msra.mxu0 0.0
    %166 = vmatpush.msra.mxu0 0.0
    %167 = vmatpush.msra.mxu0 %v57
    %168 = vmatpush.msra.mxu0 %v56
    %169 = vmatpush.msra.mxu0 %v55
    %170 = vmatpush.msra.mxu0 %v54
    %171 = vmatmul.f32.gmra.mxu0 %v60
    %v172 = vpop.f32.mrf.mxu0
    %v173 = vadd.f32 0.0, %v172
    %174 = vmatmul.f32.gmra.mxu0 %v63
    %v175 = vpop.f32.mrf.mxu0
    %v176 = vadd.f32 0.0, %v175
    %177 = vmatmul.f32.gmra.mxu0 %v66
    %v178 = vpop.f32.mrf.mxu0
    %v179 = vadd.f32 0.0, %v178
    %180 = vmatmul.f32.gmra.mxu0 %v69
    %v181 = vpop.f32.mrf.mxu0
    %v182 = vadd.f32 0.0, %v181
    %183 = vmatmul.f32.gmra.mxu0 %v72
    %v184 = vpop.f32.mrf.mxu0
    %v185 = vadd.f32 0.0, %v184
    %186 = vmatmul.f32.gmra.mxu0 %v75
    %v187 = vpop.f32.mrf.mxu0
    %v188 = vadd.f32 0.0, %v187
    %189 = vmatmul.f32.gmra.mxu0 %v78
    %v190 = vpop.f32.mrf.mxu0
    %v191 = vadd.f32 0.0, %v190
    %192 = vmatmul.f32.gmra.mxu0 %v81
    %v193 = vpop.f32.mrf.mxu0
    %v194 = vadd.f32 0.0, %v193
    %195 = vmatmul.f32.gmra.mxu0 %v84
    %v196 = vpop.f32.mrf.mxu0
    %v197 = vadd.f32 0.0, %v196
    %198 = vmatmul.f32.gmra.mxu0 %v87
    %v199 = vpop.f32.mrf.mxu0
    %v200 = vadd.f32 0.0, %v199
    %201 = vmatmul.f32.gmra.mxu0 %v90
    %v202 = vpop.f32.mrf.mxu0
    %v203 = vadd.f32 0.0, %v202
    %204 = vmatmul.f32.gmra.mxu0 %v93
    %v205 = vpop.f32.mrf.mxu0
    %v206 = vadd.f32 0.0, %v205
    %207 = vmatmul.f32.gmra.mxu0 %v96
    %v208 = vpop.f32.mrf.mxu0
    %v209 = vadd.f32 0.0, %v208
    %210 = vmatmul.f32.gmra.mxu0 %v99
    %v211 = vpop.f32.mrf.mxu0
    %v212 = vadd.f32 0.0, %v211
    %213 = vmatmul.f32.gmra.mxu0 %v102
    %v214 = vpop.f32.mrf.mxu0
    %v215 = vadd.f32 0.0, %v214
    %216 = vmatmul.f32.gmra.mxu0 %v105
    %v217 = vpop.f32.mrf.mxu0
    %v218 = vadd.f32 0.0, %v217
    %219 = vmatmul.f32.gmra.mxu0 %v108
    %v220 = vpop.f32.mrf.mxu0
    %v221 = vadd.f32 0.0, %v220
    %222 = vmatmul.f32.gmra.mxu0 %v111
    %v223 = vpop.f32.mrf.mxu0
    %v224 = vadd.f32 0.0, %v223
    %225 = vmatmul.f32.gmra.mxu0 %v114
    %v226 = vpop.f32.mrf.mxu0
    %v227 = vadd.f32 0.0, %v226
    %228 = vmatmul.f32.gmra.mxu0 %v117
    %v229 = vpop.f32.mrf.mxu0
    %v230 = vadd.f32 0.0, %v229
    %231 = vmatmul.f32.gmra.mxu0 %v120
    %v232 = vpop.f32.mrf.mxu0
    %v233 = vadd.f32 0.0, %v232
    %234 = vmatmul.f32.gmra.mxu0 %v123
    %v235 = vpop.f32.mrf.mxu0
    %v236 = vadd.f32 0.0, %v235
    %237 = vmatmul.f32.gmra.mxu0 %v126
    %v238 = vpop.f32.mrf.mxu0
    %v239 = vadd.f32 0.0, %v238
    %240 = vmatmul.f32.gmra.mxu0 %v129
    %v241 = vpop.f32.mrf.mxu0
    %v242 = vadd.f32 0.0, %v241
    %243 = vmatmul.f32.gmra.mxu0 %v132
    %v244 = vpop.f32.mrf.mxu0
    %v245 = vadd.f32 0.0, %v244
    %246 = vmatmul.f32.gmra.mxu0 %v135
    %v247 = vpop.f32.mrf.mxu0
    %v248 = vadd.f32 0.0, %v247
    %249 = vmatmul.f32.gmra.mxu0 %v138
    %v250 = vpop.f32.mrf.mxu0
    %v251 = vadd.f32 0.0, %v250
    %252 = vmatmul.f32.gmra.mxu0 %v141
    %v253 = vpop.f32.mrf.mxu0
    %v254 = vadd.f32 0.0, %v253
    %255 = vmatmul.f32.gmra.mxu0 %v144
    %v256 = vpop.f32.mrf.mxu0
    %v257 = vadd.f32 0.0, %v256
    %258 = vmatmul.f32.gmra.mxu0 %v147
    %v259 = vpop.f32.mrf.mxu0
    %v260 = vadd.f32 0.0, %v259
    %261 = vmatmul.f32.gmra.mxu0 %v150
    %v262 = vpop.f32.mrf.mxu0
    %v263 = vadd.f32 0.0, %v262
    %264 = vmatmul.f32.gmra.mxu0 %v153
    %v265 = vpop.f32.mrf.mxu0
    %v266 = vadd.f32 0.0, %v265
    %267 = vdwg.mxu0
    %268 = vst [vmem:[#allocation2] sm:$0xff] %v173
    %269 = vst [vmem:[#allocation2 + $0x8] sm:$0xff] %v176
    %270 = vst [vmem:[#allocation2 + $0x10] sm:$0xff] %v179
    %271 = vst [vmem:[#allocation2 + $0x18] sm:$0xff] %v182
    %272 = vst [vmem:[#allocation2 + $0x20] sm:$0xff] %v185
    %273 = vst [vmem:[#allocation2 + $0x28] sm:$0xff] %v188
    %274 = vst [vmem:[#allocation2 + $0x30] sm:$0xff] %v191
    %275 = vst [vmem:[#allocation2 + $0x38] sm:$0xff] %v194
    %276 = vst [vmem:[#allocation2 + $0x40] sm:$0xff] %v197
    %277 = vst [vmem:[#allocation2 + $0x48] sm:$0xff] %v200
    %278 = vst [vmem:[#allocation2 + $0x50] sm:$0xff] %v203
    %279 = vst [vmem:[#allocation2 + $0x58] sm:$0xff] %v206
    %280 = vst [vmem:[#allocation2 + $0x60] sm:$0xff] %v209
    %281 = vst [vmem:[#allocation2 + $0x68] sm:$0xff] %v212
    %282 = vst [vmem:[#allocation2 + $0x70] sm:$0xff] %v215
    %283 = vst [vmem:[#allocation2 + $0x78] sm:$0xff] %v218
    %284 = vst [vmem:[#allocation2 + $0x80] sm:$0xff] %v221
    %285 = vst [vmem:[#allocation2 + $0x88] sm:$0xff] %v224
    %286 = vst [vmem:[#allocation2 + $0x90] sm:$0xff] %v227
    %287 = vst [vmem:[#allocation2 + $0x98] sm:$0xff] %v230
    %288 = vst [vmem:[#allocation2 + $0xa0] sm:$0xff] %v233
    %289 = vst [vmem:[#allocation2 + $0xa8] sm:$0xff] %v236
    %290 = vst [vmem:[#allocation2 + $0xb0] sm:$0xff] %v239
    %291 = vst [vmem:[#allocation2 + $0xb8] sm:$0xff] %v242
    %292 = vst [vmem:[#allocation2 + $0xc0] sm:$0xff] %v245
    %293 = vst [vmem:[#allocation2 + $0xc8] sm:$0xff] %v248
    %294 = vst [vmem:[#allocation2 + $0xd0] sm:$0xff] %v251
    %295 = vst [vmem:[#allocation2 + $0xd8] sm:$0xff] %v254
    %296 = vst [vmem:[#allocation2 + $0xe0] sm:$0xff] %v257
    %297 = vst [vmem:[#allocation2 + $0xe8] sm:$0xff] %v260
    %298 = vst [vmem:[#allocation2 + $0xf0] sm:$0xff] %v263
    %299 = vst [vmem:[#allocation2 + $0xf8] sm:$0xff] %v266
    %v300 = vld [vmem:[%s2] sm:$0x1]
    %v302 = vperm.slane %v300, 0
    %v304 = vmul.f32 %v22, %v302
    %v305 = vmul.f32 %v23, %v302
    %v306 = vmul.f32 %v24, %v302
    %v307 = vmul.f32 %v25, %v302
    %v308 = vmul.f32 %v26, %v302
    %v309 = vmul.f32 %v27, %v302
    %v310 = vmul.f32 %v28, %v302
    %v311 = vmul.f32 %v29, %v302
    %v312 = vmul.f32 %v30, %v302
    %v313 = vmul.f32 %v31, %v302
    %v314 = vmul.f32 %v32, %v302
    %v315 = vmul.f32 %v33, %v302
    %v316 = vmul.f32 %v34, %v302
    %v317 = vmul.f32 %v35, %v302
    %v318 = vmul.f32 %v36, %v302
    %v319 = vmul.f32 %v37, %v302
    %v320 = vmul.f32 %v38, %v302
    %v321 = vmul.f32 %v39, %v302
    %v322 = vmul.f32 %v40, %v302
    %v323 = vmul.f32 %v41, %v302
    %v324 = vmul.f32 %v42, %v302
    %v325 = vmul.f32 %v43, %v302
    %v326 = vmul.f32 %v44, %v302
    %v327 = vmul.f32 %v45, %v302
    %v328 = vmul.f32 %v46, %v302
    %v329 = vmul.f32 %v47, %v302
    %v330 = vmul.f32 %v48, %v302
    %v331 = vmul.f32 %v49, %v302
    %v332 = vmul.f32 %v50, %v302
    %v333 = vmul.f32 %v51, %v302
    %v334 = vmul.f32 %v52, %v302
    %v335 = vmul.f32 %v53, %v302
    %v336 = vsel %vm58, %v304, 0.0
    %337 = vadd.xlane.f32.xlu0 %v336
    %v338 = vpop.xlane.xlu0 %337
    %v339 = vsel %vm58, %v305, 0.0
    %340 = vadd.xlane.f32.xlu0 %v339
    %v341 = vpop.xlane.xlu0 %340
    %v342 = vsel %vm58, %v306, 0.0
    %343 = vadd.xlane.f32.xlu0 %v342
    %v344 = vpop.xlane.xlu0 %343
    %v345 = vsel %vm58, %v307, 0.0
    %346 = vadd.xlane.f32.xlu0 %v345
    %v347 = vpop.xlane.xlu0 %346
    %v348 = vsel %vm58, %v308, 0.0
    %349 = vadd.xlane.f32.xlu0 %v348
    %v350 = vpop.xlane.xlu0 %349
    %v351 = vsel %vm58, %v309, 0.0
    %352 = vadd.xlane.f32.xlu0 %v351
    %v353 = vpop.xlane.xlu0 %352
    %v354 = vsel %vm58, %v310, 0.0
    %355 = vadd.xlane.f32.xlu0 %v354
    %v356 = vpop.xlane.xlu0 %355
    %v357 = vsel %vm58, %v311, 0.0
    %358 = vadd.xlane.f32.xlu0 %v357
    %v359 = vpop.xlane.xlu0 %358
    %v360 = vsel %vm58, %v312, 0.0
    %361 = vadd.xlane.f32.xlu0 %v360
    %v362 = vpop.xlane.xlu0 %361
    %v363 = vsel %vm58, %v313, 0.0
    %364 = vadd.xlane.f32.xlu0 %v363
    %v365 = vpop.xlane.xlu0 %364
    %v366 = vsel %vm58, %v314, 0.0
    %367 = vadd.xlane.f32.xlu0 %v366
    %v368 = vpop.xlane.xlu0 %367
    %v369 = vsel %vm58, %v315, 0.0
    %370 = vadd.xlane.f32.xlu0 %v369
    %v371 = vpop.xlane.xlu0 %370
    %v372 = vsel %vm58, %v316, 0.0
    %373 = vadd.xlane.f32.xlu0 %v372
    %v374 = vpop.xlane.xlu0 %373
    %v375 = vsel %vm58, %v317, 0.0
    %376 = vadd.xlane.f32.xlu0 %v375
    %v377 = vpop.xlane.xlu0 %376
    %v378 = vsel %vm58, %v318, 0.0
    %379 = vadd.xlane.f32.xlu0 %v378
    %v380 = vpop.xlane.xlu0 %379
    %v381 = vsel %vm58, %v319, 0.0
    %382 = vadd.xlane.f32.xlu0 %v381
    %v383 = vpop.xlane.xlu0 %382
    %v384 = vsel %vm58, %v320, 0.0
    %385 = vadd.xlane.f32.xlu0 %v384
    %v386 = vpop.xlane.xlu0 %385
    %v387 = vsel %vm58, %v321, 0.0
    %388 = vadd.xlane.f32.xlu0 %v387
    %v389 = vpop.xlane.xlu0 %388
    %v390 = vsel %vm58, %v322, 0.0
    %391 = vadd.xlane.f32.xlu0 %v390
    %v392 = vpop.xlane.xlu0 %391
    %v393 = vsel %vm58, %v323, 0.0
    %394 = vadd.xlane.f32.xlu0 %v393
    %v395 = vpop.xlane.xlu0 %394
    %v396 = vsel %vm58, %v324, 0.0
    %397 = vadd.xlane.f32.xlu0 %v396
    %v398 = vpop.xlane.xlu0 %397
    %v399 = vsel %vm58, %v325, 0.0
    %400 = vadd.xlane.f32.xlu0 %v399
    %v401 = vpop.xlane.xlu0 %400
    %v402 = vsel %vm58, %v326, 0.0
    %403 = vadd.xlane.f32.xlu0 %v402
    %v404 = vpop.xlane.xlu0 %403
    %v405 = vsel %vm58, %v327, 0.0
    %406 = vadd.xlane.f32.xlu0 %v405
    %v407 = vpop.xlane.xlu0 %406
    %v408 = vsel %vm58, %v328, 0.0
    %409 = vadd.xlane.f32.xlu0 %v408
    %v410 = vpop.xlane.xlu0 %409
    %v411 = vsel %vm58, %v329, 0.0
    %412 = vadd.xlane.f32.xlu0 %v411
    %v413 = vpop.xlane.xlu0 %412
    %v414 = vsel %vm58, %v330, 0.0
    %415 = vadd.xlane.f32.xlu0 %v414
    %v416 = vpop.xlane.xlu0 %415
    %v417 = vsel %vm58, %v331, 0.0
    %418 = vadd.xlane.f32.xlu0 %v417
    %v419 = vpop.xlane.xlu0 %418
    %v420 = vsel %vm58, %v332, 0.0
    %421 = vadd.xlane.f32.xlu0 %v420
    %v422 = vpop.xlane.xlu0 %421
    %v423 = vsel %vm58, %v333, 0.0
    %424 = vadd.xlane.f32.xlu0 %v423
    %v425 = vpop.xlane.xlu0 %424
    %v426 = vsel %vm58, %v334, 0.0
    %427 = vadd.xlane.f32.xlu0 %v426
    %v428 = vpop.xlane.xlu0 %427
    %v429 = vsel %vm58, %v335, 0.0
    %430 = vadd.xlane.f32.xlu0 %v429
    %v431 = vpop.xlane.xlu0 %430
    %vm432 = vcmask 7168
    %433 = vst.msk [vmem:[%s5] sm:$0xff] %vm432, %v338
    %434 = vst.msk [vmem:[%s5 + $0x8] sm:$0xff] %vm432, %v341
    %435 = vst.msk [vmem:[%s5 + $0x10] sm:$0xff] %vm432, %v344
    %436 = vst.msk [vmem:[%s5 + $0x18] sm:$0xff] %vm432, %v347
    %437 = vst.msk [vmem:[%s5 + $0x20] sm:$0xff] %vm432, %v350
    %438 = vst.msk [vmem:[%s5 + $0x28] sm:$0xff] %vm432, %v353
    %439 = vst.msk [vmem:[%s5 + $0x30] sm:$0xff] %vm432, %v356
    %440 = vst.msk [vmem:[%s5 + $0x38] sm:$0xff] %vm432, %v359
    %441 = vst.msk [vmem:[%s5 + $0x40] sm:$0xff] %vm432, %v362
    %442 = vst.msk [vmem:[%s5 + $0x48] sm:$0xff] %vm432, %v365
    %443 = vst.msk [vmem:[%s5 + $0x50] sm:$0xff] %vm432, %v368
    %444 = vst.msk [vmem:[%s5 + $0x58] sm:$0xff] %vm432, %v371
    %445 = vst.msk [vmem:[%s5 + $0x60] sm:$0xff] %vm432, %v374
    %446 = vst.msk [vmem:[%s5 + $0x68] sm:$0xff] %vm432, %v377
    %447 = vst.msk [vmem:[%s5 + $0x70] sm:$0xff] %vm432, %v380
    %448 = vst.msk [vmem:[%s5 + $0x78] sm:$0xff] %vm432, %v383
    %449 = vst.msk [vmem:[%s5 + $0x80] sm:$0xff] %vm432, %v386
    %450 = vst.msk [vmem:[%s5 + $0x88] sm:$0xff] %vm432, %v389
    %451 = vst.msk [vmem:[%s5 + $0x90] sm:$0xff] %vm432, %v392
    %452 = vst.msk [vmem:[%s5 + $0x98] sm:$0xff] %vm432, %v395
    %453 = vst.msk [vmem:[%s5 + $0xa0] sm:$0xff] %vm432, %v398
    %454 = vst.msk [vmem:[%s5 + $0xa8] sm:$0xff] %vm432, %v401
    %455 = vst.msk [vmem:[%s5 + $0xb0] sm:$0xff] %vm432, %v404
    %456 = vst.msk [vmem:[%s5 + $0xb8] sm:$0xff] %vm432, %v407
    %457 = vst.msk [vmem:[%s5 + $0xc0] sm:$0xff] %vm432, %v410
    %458 = vst.msk [vmem:[%s5 + $0xc8] sm:$0xff] %vm432, %v413
    %459 = vst.msk [vmem:[%s5 + $0xd0] sm:$0xff] %vm432, %v416
    %460 = vst.msk [vmem:[%s5 + $0xd8] sm:$0xff] %vm432, %v419
    %461 = vst.msk [vmem:[%s5 + $0xe0] sm:$0xff] %vm432, %v422
    %462 = vst.msk [vmem:[%s5 + $0xe8] sm:$0xff] %vm432, %v425
    %463 = vst.msk [vmem:[%s5 + $0xf0] sm:$0xff] %vm432, %v428
    %464 = vst.msk [vmem:[%s5 + $0xf8] sm:$0xff] %vm432, %v431
    %v465 = vld [vmem:[%s3] sm:$0x1]
    %v467 = vsel %vm58, %v465, 0
    %469 = vmatpush.xpose.msra.mxu0 %v105
    %470 = vmatpush.xpose.msra.mxu0 %v102
    %471 = vmatpush.xpose.msra.mxu0 %v99
    %472 = vmatpush.xpose.msra.mxu0 %v96
    %473 = vmatpush.xpose.msra.mxu0 %v93
    %474 = vmatpush.xpose.msra.mxu0 %v90
    %475 = vmatpush.xpose.msra.mxu0 %v87
    %476 = vmatpush.xpose.msra.mxu0 %v84
    %477 = vmatpush.xpose.msra.mxu0 %v81
    %478 = vmatpush.xpose.msra.mxu0 %v78
    %479 = vmatpush.xpose.msra.mxu0 %v75
    %480 = vmatpush.xpose.msra.mxu0 %v72
    %481 = vmatpush.xpose.msra.mxu0 %v69
    %482 = vmatpush.xpose.msra.mxu0 %v66
    %483 = vmatpush.xpose.msra.mxu0 %v63
    %484 = vmatpush.xpose.msra.mxu0 %v60
    %485 = vmatmul.f32.gmra.mxu0 %v467
    %v486 = vpop.f32.mrf.mxu0
    %v487 = vadd.f32 0.0, %v486
    %488 = vdwg.mxu0
    %489 = vmatpush.xpose.msra.mxu0 %v153
    %490 = vmatpush.xpose.msra.mxu0 %v150
    %491 = vmatpush.xpose.msra.mxu0 %v147
    %492 = vmatpush.xpose.msra.mxu0 %v144
    %493 = vmatpush.xpose.msra.mxu0 %v141
    %494 = vmatpush.xpose.msra.mxu0 %v138
    %495 = vmatpush.xpose.msra.mxu0 %v135
    %496 = vmatpush.xpose.msra.mxu0 %v132
    %497 = vmatpush.xpose.msra.mxu0 %v129
    %498 = vmatpush.xpose.msra.mxu0 %v126
    %499 = vmatpush.xpose.msra.mxu0 %v123
    %500 = vmatpush.xpose.msra.mxu0 %v120
    %501 = vmatpush.xpose.msra.mxu0 %v117
    %502 = vmatpush.xpose.msra.mxu0 %v114
    %503 = vmatpush.xpose.msra.mxu0 %v111
    %504 = vmatpush.xpose.msra.mxu0 %v108
    %505 = vmatmul.f32.gmra.mxu0 %v467
    %v506 = vpop.f32.mrf.mxu0
    %v507 = vadd.f32 0.0, %v506
    %508 = vdwg.mxu0
    %v511 = vrot.slane %v507, 7
    %vm512 = vcmask 1040384
    %v513 = vsel %vm512, %v487, %v511
    %v515 = vlaneseq
    %vm516 = vcmp.ge.s32.totalorder %v515, 0
    %vm517 = vcmp.lt.s32.totalorder %v515, 256
    %vm518 = vmand %vm516, %vm517
    %519 = vst.msk [vmem:[#allocation4] sm:$0x3] %vm518, %v513
    // Predicated region
    $region18: #{tpu_custom_call.1} parent=1 // pred_check
      _
    $region19: #{tpu_custom_call.1} parent=1 // pred_check_branch
      %521 = sbr.rel (0) target = $region21
    $region20: #{tpu_custom_call.1} parent=1 // pred_region
      %523 = vsyncadd [#allocation3], 0
      %s524 = sshll.u32 [#allocation2], 4
      %s525 = int_to_ptr.vmem [resolvable:$true] %s524
      %s526 = sshll.u32 %s4, 4
      %s527 = int_to_ptr.hbm [resolvable:$true] %s526
      %532 = dma.vmem_to_hbm [thread:$0]  %s525, 4096, %s527, [#allocation3], 128, 128, 8
    $region21: #{tpu_custom_call.1} parent=1 // pred_fallthru
      _
    // Predicated region
    $region22: #{tpu_custom_call.1} parent=1 // pred_check
      _
    $region23: #{tpu_custom_call.1} parent=1 // pred_check_branch
      %534 = sbr.rel (0) target = $region25
    $region24: #{tpu_custom_call.1} parent=1 // pred_region
      _
    $region25: #{tpu_custom_call.1} parent=1 // pred_fallthru
      _
    // Predicated region
    $region26: #{tpu_custom_call.1} parent=1 // pred_check
      _
    $region27: #{tpu_custom_call.1} parent=1 // pred_check_branch
      %536 = sbr.rel (0) target = $region29
    $region28: #{tpu_custom_call.1} parent=1 // pred_region
      %538 = vsyncadd [#allocation5], 0
      %s540 = sshll.u32 [#allocation4], 4
      %s541 = int_to_ptr.vmem [resolvable:$true] %s540
      %s542 = sshll.u32 %s6, 4
      %s543 = int_to_ptr.hbm [resolvable:$true] %s542
      %545 = dma.vmem_to_hbm [thread:$0]  %s541, 32, %s543, [#allocation5]
    $region29: #{tpu_custom_call.1} parent=1 // pred_fallthru
      _
    // Predicated region
    $region30: #{tpu_custom_call.1} parent=1 // pred_check
      _
    $region31: #{tpu_custom_call.1} parent=1 // pred_check_branch
      %547 = sbr.rel (0) target = $region33
    $region32: #{tpu_custom_call.1} parent=1 // pred_region
      %549 = dma.done [#allocation3], 4096
    $region33: #{tpu_custom_call.1} parent=1 // pred_fallthru
      _
    // Predicated region
    $region34: #{tpu_custom_call.1} parent=1 // pred_check
      _
    $region35: #{tpu_custom_call.1} parent=1 // pred_check_branch
      %551 = sbr.rel (0) target = $region37
    $region36: #{tpu_custom_call.1} parent=1 // pred_region
      _
    $region37: #{tpu_custom_call.1} parent=1 // pred_fallthru
      _
    // Predicated region
    $region38: #{tpu_custom_call.1} parent=1 // pred_check
      _
    $region39: #{tpu_custom_call.1} parent=1 // pred_check_branch
      %553 = sbr.rel (0) target = $region41
    $region40: #{tpu_custom_call.1} parent=1 // pred_region
      %555 = dma.done [#allocation5], 32
    $region41: #{tpu_custom_call.1} parent=1 // pred_fallthru
      _
    %556 = vsyncpa [#allocation3], 1
    %557 = vsyncpa [#allocation5], 1

</llo_original>
